<compile_context>
chip_gen: v5e
topology: v5e:2x2
jax: 0.10.0
libtpu: 0.0.40
codegen_flags: <defaults>
</compile_context>

<pallas_src>
import jax
import jax.numpy as jnp
from jax.experimental import pallas as pl
from jax.experimental.pallas import tpu as pltpu

NUM_HU = 8  # numHU in the PyTorch module


def _sigmoid(z):
    # exact sigmoid: exp on the EUP, one exact divide (EUP is idle here and
    # approx reciprocal error would compound through the recurrence).
    return 1.0 / (1.0 + jnp.exp(-z))


def _meta_lstm_seq_kernel(x_ref, w_ref, s0_ref, out_ref, state_ref):
    """One fused pallas_call over the whole recurrence.

    Per grid step t (grid=(T,), "arbitrary"):
      x_ref     : (B, Dx)        exogenous input x_t = cat(dL_t, L_t, th_t1)
      w_ref     : (Dx + 4H, 4H)  packed gate weights, VMEM-resident (constant
                                 index_map); last H rows are zeros (c_t1 slot)
      s0_ref    : (B, 4H)        initial packed state [i|f|h|c], read at t == 0
      out_ref   : (B, 4H)        per-step packed output [i_t|f_t|h_t|c_t]
      state_ref : (B, 4H)        VMEM scratch carrying the packed state
    """
    H = NUM_HU
    t = pl.program_id(0)

    @pl.when(t == 0)
    def _():
        state_ref[...] = s0_ref[...]

    x = x_ref[...]                                # (B, Dx)
    st = state_ref[...]                           # (B, 4H)  [i|f|h|c]
    act = jnp.concatenate([x, st], axis=1)        # (B, Dx + 4H)

    # Single MXU pass: all four gate pre-activations, columns [i|f|g|o].
    pre = jnp.dot(act, w_ref[...], preferred_element_type=jnp.float32)

    i_t = _sigmoid(pre[:, 0 * H:1 * H])
    f_t = _sigmoid(pre[:, 1 * H:2 * H])
    g_t = jnp.tanh(pre[:, 2 * H:3 * H])
    o_t = _sigmoid(pre[:, 3 * H:4 * H])

    c_t1 = st[:, 3 * H:4 * H]
    c_t = f_t * c_t1 + i_t * g_t
    h_t = o_t * jnp.tanh(c_t)

    # Packed [i|f|h|c]: i_t / f_t stay at their matmul lanes, and this slab is
    # directly the next step's recurrent state (no wrapper re-pack between
    # steps).
    new_state = jnp.concatenate([i_t, f_t, h_t, c_t], axis=1)
    state_ref[...] = new_state
    out_ref[...] = new_state


def prepare_params(params, x_width):
    """One-time packing of the four PyTorch-convention (H, Dx+H) gate weights
    into a single zero-padded (Dx+4H, 4H) block matrix for `act @ W`, where
    the activation row is [x_t | i_t1 | f_t1 | h_t1 | c_t1] (c_t1 rows are
    zeros — it only participates in the elementwise cell update)."""
    H = NUM_HU
    Dx = x_width
    w_packed = jnp.zeros((Dx + 4 * H, 4 * H), jnp.float32)

    def put(wp, w, gate_idx, state_slot):
        wt = jnp.transpose(w).astype(jnp.float32)          # (Dx+H, H)
        cols = slice(gate_idx * H, (gate_idx + 1) * H)
        wp = wp.at[:Dx, cols].set(wt[:Dx, :])              # x-part
        r0 = Dx + state_slot * H
        wp = wp.at[r0:r0 + H, cols].set(wt[Dx:, :])        # state-part
        return wp

    # packed state slots: 0 -> i_t1, 1 -> f_t1, 2 -> h_t1, 3 -> c_t1 (zeros)
    w_packed = put(w_packed, params["wi"], 0, 0)   # i gate reads i_t1
    w_packed = put(w_packed, params["wf"], 1, 1)   # f gate reads f_t1
    w_packed = put(w_packed, params["wg"], 2, 2)   # g gate reads h_t1
    w_packed = put(w_packed, params["wo"], 3, 2)   # o gate reads h_t1
    return w_packed


def meta_lstm_fused(x_seq, state0_packed, w_packed):
    """Fused T-step recurrence.

    x_seq         : (T, B, Dx)  per-step x_t
    state0_packed : (B, 4H)     initial packed state [i_t1|f_t1|h_t1|c_t1]
    w_packed      : (Dx+4H, 4H) from prepare_params()
    returns       : (T, B, 4H)  per-step packed [i_t|f_t|h_t|c_t]
    """
    H = NUM_HU
    T, B, Dx = x_seq.shape

    # Pad batch to the f32 sublane minimum (8) so the vreg tile is legal/full.
    B_pad = max(8, ((B + 7) // 8) * 8)
    x_seq = x_seq.astype(jnp.float32)
    state0_packed = state0_packed.astype(jnp.float32)
    if B_pad != B:
        x_seq = jnp.pad(x_seq, ((0, 0), (0, B_pad - B), (0, 0)))
        state0_packed = jnp.pad(state0_packed, ((0, B_pad - B), (0, 0)))

    out = pl.pallas_call(
        _meta_lstm_seq_kernel,
        out_shape=jax.ShapeDtypeStruct((T, B_pad, 4 * H), jnp.float32),
        grid_spec=pltpu.PrefetchScalarGridSpec(
            num_scalar_prefetch=0,
            grid=(T,),
            in_specs=[
                # per-step x_t tile
                pl.BlockSpec((None, B_pad, Dx), lambda t: (t, 0, 0)),
                # weights stay VMEM-resident across the whole recurrence
                pl.BlockSpec((Dx + 4 * H, 4 * H), lambda t: (0, 0)),
                # initial state (only consumed at t == 0)
                pl.BlockSpec((B_pad, 4 * H), lambda t: (0, 0)),
            ],
            out_specs=pl.BlockSpec((None, B_pad, 4 * H), lambda t: (t, 0, 0)),
            scratch_shapes=[pltpu.VMEM((B_pad, 4 * H), jnp.float32)],
        ),
        compiler_params=pltpu.CompilerParams(
            dimension_semantics=("arbitrary",)),
    )(x_seq, w_packed, state0_packed)

    return out[:, :B, :]


# Fused multi-step entry point (state stays packed across steps).
meta_learning_sequence = jax.jit(meta_lstm_fused)


@jax.jit
def meta_learning_forward(th_t1, dL_t, L_t, state, w_packed):
    """Module-equivalent single step. state = (i_t1, f_t1, h_t1, c_t1)."""
    H = NUM_HU
    i_t1, f_t1, h_t1, c_t1 = state
    x_t = jnp.concatenate([dL_t, L_t, th_t1], axis=1).astype(jnp.float32)
    s0 = jnp.concatenate(
        [i_t1, f_t1, h_t1, c_t1], axis=1).astype(jnp.float32)   # [i|f|h|c]
    out = meta_lstm_fused(x_t[None], s0, w_packed)[0]           # (B, 4H)
    i_t = out[:, 0 * H:1 * H]
    f_t = out[:, 1 * H:2 * H]
    h_t = out[:, 2 * H:3 * H]
    c_t = out[:, 3 * H:4 * H]
    return h_t, i_t, f_t, c_t


def _ref_step(x_t, state, params):
    """Pure-JAX single-step reference (exact sigmoid)."""
    i1, f1, h1, c1 = state
    i_t = jax.nn.sigmoid(jnp.concatenate([x_t, i1], 1) @ params["wi"].T)
    f_t = jax.nn.sigmoid(jnp.concatenate([x_t, f1], 1) @ params["wf"].T)
    xh = jnp.concatenate([x_t, h1], 1)
    ci_t = jnp.tanh(xh @ params["wg"].T)
    o_t = jax.nn.sigmoid(xh @ params["wo"].T)
    c_t = f_t * c1 + i_t * ci_t
    h_t = o_t * jnp.tanh(c_t)
    return h_t, i_t, f_t, c_t


if __name__ == "__main__":
    key = jax.random.PRNGKey(0)
    B = 2          # batch
    d = 2          # per-input feature width (th_t1, dL_t, L_t)
    H = NUM_HU     # 8 hidden units
    Dx = 3 * d     # width of x_t
    D = Dx + H     # in_features of each Linear (x_t concat with a state)
    T = 8          # demo length for the fused recurrence

    keys = jax.random.split(key, 16)
    # deterministic parameter init (PyTorch nn.Linear weight shape: (out, in))
    params = {
        "wi": jax.random.normal(keys[0], (H, D), jnp.float32) * 0.1,
        "wf": jax.random.normal(keys[1], (H, D), jnp.float32) * 0.1,
        "wg": jax.random.normal(keys[2], (H, D), jnp.float32) * 0.1,
        "wo": jax.random.normal(keys[3], (H, D), jnp.float32) * 0.1,
    }
    # module inputs
    th_t1 = jax.random.normal(keys[4], (B, d), jnp.float32)
    dL_t = jax.random.normal(keys[5], (B, d), jnp.float32)
    L_t = jax.random.normal(keys[6], (B, d), jnp.float32)
    # recurrent state (undefined in the PyTorch __init__; initialized here)
    state = (
        jax.random.normal(keys[7], (B, H), jnp.float32),   # i_t1
        jax.random.normal(keys[8], (B, H), jnp.float32),   # f_t1
        jax.random.normal(keys[9], (B, H), jnp.float32),   # h_t1
        jax.random.normal(keys[10], (B, H), jnp.float32),  # c_t1
    )

    # one-time weight packing (hoisted out of the per-call path)
    w_packed = jax.block_until_ready(prepare_params(params, Dx))

    # ---- single step (module forward semantics) ----
    outs = meta_learning_forward(th_t1, dL_t, L_t, state, w_packed)
    jax.block_until_ready(outs)

    x_t = jnp.concatenate([dL_t, L_t, th_t1], axis=1)
    refs = _ref_step(x_t, state, params)   # (h, i, f, c)
    for got, want in zip(outs, refs):
        assert jnp.allclose(got, want, atol=5e-3, rtol=5e-3), \
            "single-step mismatch vs reference"

    # ---- fused T-step recurrence (one pallas_call for the whole loop) ----
    x_seq = jax.random.normal(keys[11], (T, B, Dx), jnp.float32)
    s0 = jnp.concatenate(state, axis=1)                     # [i|f|h|c]
    out_seq = jax.block_until_ready(
        meta_learning_sequence(x_seq, s0, w_packed))        # (T, B, 4H)

    st = state
    for t in range(T):
        h_r, i_r, f_r, c_r = _ref_step(x_seq[t], st, params)
        assert jnp.allclose(out_seq[t, :, 0 * H:1 * H], i_r, atol=2e-2, rtol=2e-2)
        assert jnp.allclose(out_seq[t, :, 1 * H:2 * H], f_r, atol=2e-2, rtol=2e-2)
        assert jnp.allclose(out_seq[t, :, 2 * H:3 * H], h_r, atol=2e-2, rtol=2e-2)
        assert jnp.allclose(out_seq[t, :, 3 * H:4 * H], c_r, atol=2e-2, rtol=2e-2)
        st = (i_r, f_r, h_r, c_r)   # module's state update order

    print("KERNEL_OK")
</pallas_src>

<mosaic_0001>
module attributes {stable_mosaic.version = 11 : i64} {
  func.func @_meta_lstm_seq_kernel(%arg0: i32, %arg1: memref<1x8x6xf32, #tpu.memory_space<vmem>>, %arg2: memref<38x32xf32, #tpu.memory_space<vmem>>, %arg3: memref<8x32xf32, #tpu.memory_space<vmem>>, %arg4: memref<1x8x32xf32, #tpu.memory_space<vmem>>, %arg5: memref<8x32xf32, #tpu.memory_space<vmem>>) attributes {dimension_semantics = [#tpu.dimension_semantics<arbitrary>], iteration_bounds = array<i64: 1>, scalar_prefetch = 0 : i64, scratch_operands = 1 : i64, tpu.core_type = #tpu.core_type<tc>, window_params = [{transform_indices = @transform_0, window_bounds = array<i64: 1, 8, 6>}, {pipeline_mode = #tpu.pipeline_mode<synchronous>, transform_indices = @transform_1, window_bounds = array<i64: 38, 32>}, {pipeline_mode = #tpu.pipeline_mode<synchronous>, transform_indices = @transform_2, window_bounds = array<i64: 8, 32>}, {transform_indices = @transform_3, window_bounds = array<i64: 1, 8, 32>}]} {
    %c0_i32 = arith.constant 0 : i32
    %0 = arith.cmpi eq, %arg0, %c0_i32 : i32
    %1 = arith.extui %0 : i1 to i32
    %c0_i32_0 = arith.constant 0 : i32
    %2 = arith.cmpi ne, %1, %c0_i32_0 : i32
    scf.if %2 {
      %c0_21 = arith.constant 0 : index
      %c0_22 = arith.constant 0 : index
      %46 = vector.load %arg3[%c0_21, %c0_22] : memref<8x32xf32, #tpu.memory_space<vmem>>, vector<8x32xf32>
      %c0_23 = arith.constant 0 : index
      %c0_24 = arith.constant 0 : index
      %47 = vector.load %arg5[%c0_23, %c0_24] : memref<8x32xf32, #tpu.memory_space<vmem>>, vector<8x32xf32>
      tpu.vector_store %arg5[%c0_23, %c0_24], %46 {strides = array<i32>} : memref<8x32xf32, #tpu.memory_space<vmem>>, vector<8x32xf32>,
    } else {
    }
    %c0 = arith.constant 0 : index
    %c0_1 = arith.constant 0 : index
    %c0_2 = arith.constant 0 : index
    %3 = vector.load %arg1[%c0, %c0_1, %c0_2] : memref<1x8x6xf32, #tpu.memory_space<vmem>>, vector<1x8x6xf32>
    %4 = vector.shape_cast %3 : vector<1x8x6xf32> to vector<8x6xf32>
    %c0_3 = arith.constant 0 : index
    %c0_4 = arith.constant 0 : index
    %5 = vector.load %arg5[%c0_3, %c0_4] : memref<8x32xf32, #tpu.memory_space<vmem>>, vector<8x32xf32>
    %6 = tpu.concatenate %4, %5 in 1 : vector<8x6xf32>, vector<8x32xf32> -> vector<8x38xf32>
    %c0_5 = arith.constant 0 : index
    %c0_6 = arith.constant 0 : index
    %7 = vector.load %arg2[%c0_5, %c0_6] : memref<38x32xf32, #tpu.memory_space<vmem>>, vector<38x32xf32>
    %cst = arith.constant dense<0.000000e+00> : vector<8x32xf32>
    %8 = tpu.matmul %6, %7, %cst {dimension_numbers = #tpu.dot_dimension_numbers<[1], [0], [0], [1], [0, 0, 1, 1], [], []>} : vector<8x38xf32>, vector<38x32xf32>, vector<8x32xf32> -> vector<8x32xf32>
    %9 = vector.extract_strided_slice %8 {offsets = [0, 0], sizes = [8, 8], strides = [1, 1]} : vector<8x32xf32> to vector<8x8xf32>
    %cst_7 = arith.constant 0.000000e+00 : f32
    %10 = vector.broadcast %cst_7 : f32 to vector<8x8xf32>
    %11 = arith.subf %10, %9 : vector<8x8xf32>
    %12 = math.exp %11 : vector<8x8xf32>
    %cst_8 = arith.constant 1.000000e+00 : f32
    %13 = vector.broadcast %cst_8 : f32 to vector<8x8xf32>
    %14 = arith.addf %13, %12 : vector<8x8xf32>
    %cst_9 = arith.constant 1.000000e+00 : f32
    %15 = vector.broadcast %cst_9 : f32 to vector<8x8xf32>
    %16 = arith.divf %15, %14 : vector<8x8xf32>
    %17 = vector.extract_strided_slice %8 {offsets = [0, 8], sizes = [8, 8], strides = [1, 1]} : vector<8x32xf32> to vector<8x8xf32>
    %cst_10 = arith.constant 0.000000e+00 : f32
    %18 = vector.broadcast %cst_10 : f32 to vector<8x8xf32>
    %19 = arith.subf %18, %17 : vector<8x8xf32>
    %20 = math.exp %19 : vector<8x8xf32>
    %cst_11 = arith.constant 1.000000e+00 : f32
    %21 = vector.broadcast %cst_11 : f32 to vector<8x8xf32>
    %22 = arith.addf %21, %20 : vector<8x8xf32>
    %cst_12 = arith.constant 1.000000e+00 : f32
    %23 = vector.broadcast %cst_12 : f32 to vector<8x8xf32>
    %24 = arith.divf %23, %22 : vector<8x8xf32>
    %25 = vector.extract_strided_slice %8 {offsets = [0, 16], sizes = [8, 8], strides = [1, 1]} : vector<8x32xf32> to vector<8x8xf32>
    %26 = math.tanh %25 : vector<8x8xf32>
    %27 = vector.extract_strided_slice %8 {offsets = [0, 24], sizes = [8, 8], strides = [1, 1]} : vector<8x32xf32> to vector<8x8xf32>
    %cst_13 = arith.constant 0.000000e+00 : f32
    %28 = vector.broadcast %cst_13 : f32 to vector<8x8xf32>
    %29 = arith.subf %28, %27 : vector<8x8xf32>
    %30 = math.exp %29 : vector<8x8xf32>
    %cst_14 = arith.constant 1.000000e+00 : f32
    %31 = vector.broadcast %cst_14 : f32 to vector<8x8xf32>
    %32 = arith.addf %31, %30 : vector<8x8xf32>
    %cst_15 = arith.constant 1.000000e+00 : f32
    %33 = vector.broadcast %cst_15 : f32 to vector<8x8xf32>
    %34 = arith.divf %33, %32 : vector<8x8xf32>
    %35 = vector.extract_strided_slice %5 {offsets = [0, 24], sizes = [8, 8], strides = [1, 1]} : vector<8x32xf32> to vector<8x8xf32>
    %36 = arith.mulf %24, %35 : vector<8x8xf32>
    %37 = arith.mulf %16, %26 : vector<8x8xf32>
    %38 = arith.addf %36, %37 : vector<8x8xf32>
    %39 = math.tanh %38 : vector<8x8xf32>
    %40 = arith.mulf %34, %39 : vector<8x8xf32>
    %41 = tpu.concatenate %16, %24, %40, %38 in 1 : vector<8x8xf32>, vector<8x8xf32>, vector<8x8xf32>, vector<8x8xf32> -> vector<8x32xf32>
    %c0_16 = arith.constant 0 : index
    %c0_17 = arith.constant 0 : index
    %42 = vector.load %arg5[%c0_16, %c0_17] : memref<8x32xf32, #tpu.memory_space<vmem>>, vector<8x32xf32>
    tpu.vector_store %arg5[%c0_16, %c0_17], %41 {strides = array<i32>} : memref<8x32xf32, #tpu.memory_space<vmem>>, vector<8x32xf32>,
    %c0_18 = arith.constant 0 : index
    %c0_19 = arith.constant 0 : index
    %c0_20 = arith.constant 0 : index
    %43 = vector.load %arg4[%c0_18, %c0_19, %c0_20] : memref<1x8x32xf32, #tpu.memory_space<vmem>>, vector<1x8x32xf32>
    %44 = vector.shape_cast %43 : vector<1x8x32xf32> to vector<8x32xf32>
    %45 = vector.shape_cast %41 : vector<8x32xf32> to vector<1x8x32xf32>
    tpu.vector_store %arg4[%c0_18, %c0_19, %c0_20], %45 {strides = array<i32>} : memref<1x8x32xf32, #tpu.memory_space<vmem>>, vector<1x8x32xf32>,
    return
  }
  func.func @transform_0(%arg0: i32) -> (i32, i32, i32) {
    %c0_i32 = arith.constant 0 : i32
    %c0_i32_0 = arith.constant 0 : i32
    %c0_i32_1 = arith.constant 0 : i32
    return %arg0, %c0_i32, %c0_i32_0 : i32, i32, i32
  }
  func.func @transform_1(%arg0: i32) -> (i32, i32) {
    %c0_i32 = arith.constant 0 : i32
    %c0_i32_0 = arith.constant 0 : i32
    %c0_i32_1 = arith.constant 0 : i32
    return %c0_i32, %c0_i32_0 : i32, i32
  }
  func.func @transform_2(%arg0: i32) -> (i32, i32) {
    %c0_i32 = arith.constant 0 : i32
    %c0_i32_0 = arith.constant 0 : i32
    %c0_i32_1 = arith.constant 0 : i32
    return %c0_i32, %c0_i32_0 : i32, i32
  }
  func.func @transform_3(%arg0: i32) -> (i32, i32, i32) {
    %c0_i32 = arith.constant 0 : i32
    %c0_i32_0 = arith.constant 0 : i32
    %c0_i32_1 = arith.constant 0 : i32
    return %arg0, %c0_i32, %c0_i32_0 : i32, i32, i32
  }
}

</mosaic_0001>

<llo_original>
// kernel: meta_learning_forward.1
$region0: #{meta_learning_forward.1}
  #allocation0 [shape = 'u32[]', space=smem, size = 0x4, offset = 0x4, fixed_abs, tag = 'smem constant byte address 0x4 - core index']
  #allocation1 [shape = 'u32[72,128]{1,0:T(1,128)}', space=vmem, size = 0x9000, scoped, tag = 'internal scratch']
  #allocation2 [shape = 'f32[8,32]{1,0:T(8,128)}', space=vmem, size = 0x1000, scoped, tag = 'scratch operand']
  %s0 = inlined_call_operand.vmem [shape: f32[1,8,6], index: 0, kind: input, shape index: {}]
  %s1 = inlined_call_operand.vmem [shape: f32[38,32], index: 1, kind: input, shape index: {}]
  %s2 = inlined_call_operand.vmem [shape: f32[8,32], index: 2, kind: input, shape index: {}]
  %s3 = inlined_call_operand.vmem [shape: f32[1,8,32], index: 3, kind: output, shape index: {}]
  %s4 = sld [smem:[#allocation0]]
  $region26: #{meta_learning_forward.1} parent=0
    _
  %s6 = ssub.s32 1, %s4
  %s7 = scalar_select 0, %s6, %s4
  // Predicated region
  $region2: #{meta_learning_forward.1} parent=0 // pred_check
    _
  $region3: #{meta_learning_forward.1} parent=0 // pred_check_branch
    %9 = sbr.rel (0) target = $region5
  $region4: #{meta_learning_forward.1} parent=0 // pred_region
    _
  $region5: #{meta_learning_forward.1} parent=0 // pred_fallthru
    _
  // Predicated region
  $region6: #{meta_learning_forward.1} parent=0 // pred_check
    _
  $region7: #{meta_learning_forward.1} parent=0 // pred_check_branch
    %11 = sbr.rel (0) target = $region9
  $region8: #{meta_learning_forward.1} parent=0 // pred_region
    _
  $region9: #{meta_learning_forward.1} parent=0 // pred_fallthru
    _
  // Predicated region
  $region10: #{meta_learning_forward.1} parent=0 // pred_check
    _
  $region11: #{meta_learning_forward.1} parent=0 // pred_check_branch
    %13 = sbr.rel (0) target = $region13
  $region12: #{meta_learning_forward.1} parent=0 // pred_region
    _
  $region13: #{meta_learning_forward.1} parent=0 // pred_fallthru
    _
  %p14 = scmp.eq.s32.totalorder 0, 0
  // Predicated region
  $region14: #{meta_learning_forward.1} parent=0 // pred_check
    %p15 = pneg %p14
  $region15: #{meta_learning_forward.1} parent=0 // pred_check_branch
    %17 = sbr.rel (%p15) target = $region17
  $region16: #{meta_learning_forward.1} parent=0 // pred_region
    %v18 = vld [vmem:[%s2] sm:$0xff]
    %vm19 = vcmask 261120
    %20 = vst.msk [vmem:[#allocation2] sm:$0xff] %vm19, %v18
  $region17: #{meta_learning_forward.1} parent=0 // pred_fallthru
    _
  %v21 = vld [vmem:[%s0] sm:$0xff]
  %v22 = vld [vmem:[#allocation2] sm:$0xff]
  %24 = vrot.lane.b32.xlu0 %v22, 6
  %v25 = vpop.permute.xlu0 %24
  %vm27 = vcmask 48128
  %v28 = vsel %vm27, %v21, %v25
  %v29 = vld [vmem:[%s1] sm:$0xff]
  %v30 = vld [vmem:[%s1 + $0x8] sm:$0xff]
  %v31 = vld [vmem:[%s1 + $0x10] sm:$0xff]
  %v32 = vld [vmem:[%s1 + $0x18] sm:$0xff]
  %v33 = vld [vmem:[%s1 + $0x20] sm:$0x3f]
  %vm34 = vcmask 310272
  %v36 = vsel %vm34, %v28, 0
  %vm38 = vcmask 1045504
  %v40 = vsel %vm38, %v33, 0
  %42 = vmatpush.msra.mxu0 0.0
  %43 = vmatpush.msra.mxu0 0.0
  %44 = vmatpush.msra.mxu0 0.0
  %45 = vmatpush.msra.mxu0 0.0
  %46 = vmatpush.msra.mxu0 0.0
  %47 = vmatpush.msra.mxu0 0.0
  %48 = vmatpush.msra.mxu0 0.0
  %49 = vmatpush.msra.mxu0 0.0
  %50 = vmatpush.msra.mxu0 0.0
  %51 = vmatpush.msra.mxu0 0.0
  %52 = vmatpush.msra.mxu0 0.0
  %53 = vmatpush.msra.mxu0 %v40
  %54 = vmatpush.msra.mxu0 %v32
  %55 = vmatpush.msra.mxu0 %v31
  %56 = vmatpush.msra.mxu0 %v30
  %57 = vmatpush.msra.mxu0 %v29
  %58 = vmatmul.f32.gmra.mxu0 %v36
  %v59 = vpop.f32.mrf.mxu0
  %v60 = vadd.f32 0.0, %v59
  %61 = vdwg.mxu0
  %v62 = vsub.f32 0.0, %v60
  %v63 = vmul.f32 %v62, 1.442695
  %v64 = vpow.pop %v63
  %v65 = vadd.f32 %v64, 1.0
  %v66 = vrcp.pop %v65
  %v67 = vmul.f32 %v65, %v66
  %v68 = vsub.f32 1.0, %v67
  %v69 = vmul.f32 %v66, %v68
  %v70 = vadd.f32 %v66, %v69
  %vm71 = vweird.f32 %v65
  %vm72 = vweird.f32 %v66
  %vm73 = vmor %vm71, %vm72
  %v74 = vsel %vm73, %v66, %v70
  %v75 = vand.u32 2147483647, %v65
  %vm76 = vcmp.eq.f32.partialorder %v75, 8.507059e+37
  %v77 = vand.u32 %v65, 2147483648
  %v78 = vor.u32 1.1754944e-38, %v77
  %v79 = vsel %vm76, %v78, %v74
  %v80 = vmul.f32 1.0, %v79
  %v81 = vtanh.pop %v60
  %82 = vrot.lane.b32.xlu0 %v22, 112
  %v83 = vpop.permute.xlu0 %82
  %v85 = vmul.f32 %v80, %v83
  %87 = vrot.lane.b32.xlu0 %v81, 112
  %v88 = vpop.permute.xlu0 %87
  %v90 = vmul.f32 %v80, %v88
  %92 = vrot.lane.b32.xlu0 %v90, 8
  %v93 = vpop.permute.xlu0 %92
  %v95 = vadd.f32 %v85, %v93
  %v96 = vtanh.pop %v95
  %98 = vrot.lane.b32.xlu0 %v96, 16
  %v99 = vpop.permute.xlu0 %98
  %v101 = vmul.f32 %v80, %v99
  %103 = vrot.lane.b32.xlu0 %v101, 120
  %v104 = vpop.permute.xlu0 %103
  %107 = vrot.lane.b32.xlu0 %v95, 16
  %v108 = vpop.permute.xlu0 %107
  %vm110 = vcmask 130048
  %v111 = vsel %vm110, %v80, %v104
  %vm112 = vcmask 195584
  %v113 = vsel %vm112, %v111, %v108
  %vm114 = vcmask 261120
  %115 = vst.msk [vmem:[#allocation2] sm:$0xff] %vm114, %v113
  %116 = vst.msk [vmem:[%s3] sm:$0xff] %vm114, %v113
  // Predicated region
  $region18: #{meta_learning_forward.1} parent=0 // pred_check
    _
  $region19: #{meta_learning_forward.1} parent=0 // pred_check_branch
    %118 = sbr.rel (0) target = $region21
  $region20: #{meta_learning_forward.1} parent=0 // pred_region
    _
  $region21: #{meta_learning_forward.1} parent=0 // pred_fallthru
    _
  // Predicated region
  $region22: #{meta_learning_forward.1} parent=0 // pred_check
    _
  $region23: #{meta_learning_forward.1} parent=0 // pred_check_branch
    %120 = sbr.rel (0) target = $region25
  $region24: #{meta_learning_forward.1} parent=0 // pred_region
    _
  $region25: #{meta_learning_forward.1} parent=0 // pred_fallthru
    _

</llo_original>
